<compile_context>
chip_gen: v5e
topology: v5e:2x2
jax: 0.10.0
libtpu: 0.0.40
codegen_flags: <defaults>
</compile_context>

<pallas_src>
import functools

import jax
import jax.numpy as jnp
from jax.experimental import pallas as pl
from jax.experimental.pallas import tpu as pltpu


LANE_WIDTH = 1024      # lane-dense last dim (multiple of 128)
ROW_TILE = 512         # 512 x 1024 x f32 = 2 MiB per block


def _relux_kernel(x_ref, o_ref, *, thre):
    x = x_ref[...]
    lo = jnp.zeros((), dtype=x.dtype)
    hi = jnp.asarray(thre, dtype=x.dtype)
    o_ref[...] = jnp.minimum(jnp.maximum(x, lo), hi)


def relux(x: jax.Array, *, thre: float = 8.0,
          row_tile: int = ROW_TILE, lane_width: int = LANE_WIDTH) -> jax.Array:
    """Elementwise ReLUX forward: clamp(x, 0, thre). Accepts any shape."""
    orig_shape = x.shape
    xf = x.reshape(-1)
    n = xf.shape[0]

    # Pad only to a multiple of the lane-dense width (at most lane_width - 1
    # elements); the partial last *row block* is handled by Pallas via a
    # cdiv grid, so no full-tensor pad is needed.
    n_pad = pl.cdiv(n, lane_width) * lane_width
    if n_pad != n:
        xf = jnp.pad(xf, (0, n_pad - n))
    rows = n_pad // lane_width
    x2d = xf.reshape(rows, lane_width)

    # Full-extent block when the array is smaller than one tile (always a
    # legal block shape); otherwise an (8,128)-aligned 2 MiB tile with a
    # possibly-partial last block.
    rt = row_tile if rows >= row_tile else rows
    grid = (pl.cdiv(rows, rt),)

    out2d = pl.pallas_call(
        functools.partial(_relux_kernel, thre=thre),
        out_shape=jax.ShapeDtypeStruct((rows, lane_width), x.dtype),
        grid=grid,
        in_specs=[pl.BlockSpec((rt, lane_width), lambda i: (i, 0))],
        out_specs=pl.BlockSpec((rt, lane_width), lambda i: (i, 0)),
        compiler_params=pltpu.CompilerParams(
            dimension_semantics=("parallel",),
        ),
    )(x2d)

    out = out2d.reshape(-1)
    if n_pad != n:
        out = out[:n]
    return out.reshape(orig_shape)


def _reference(x, thre=8.0):
    # Pure-JAX reference mirroring the PyTorch forward.
    return jnp.clip(x, 0.0, thre)


if __name__ == "__main__":
    key = jax.random.PRNGKey(0)
    # Small NCHW activation consistent with the module's usage; scale so the
    # clamp is exercised on both ends (negatives and values > 8).
    x = jax.random.normal(key, (2, 4, 16, 16), dtype=jnp.float32) * 6.0

    y = relux(x, thre=8.0)
    jax.block_until_ready(y)

    y_ref = _reference(x, thre=8.0)
    assert y.shape == x.shape and y.dtype == x.dtype
    assert jnp.allclose(y, y_ref, atol=0.0), "mismatch vs reference"

    print("KERNEL_OK")
</pallas_src>

<mosaic_0001>
module attributes {stable_mosaic.version = 11 : i64} {
  func.func @_relux_kernel(%arg0: i32, %arg1: memref<2x1024xf32, #tpu.memory_space<vmem>>, %arg2: memref<2x1024xf32, #tpu.memory_space<vmem>>) attributes {dimension_semantics = [#tpu.dimension_semantics<parallel>], iteration_bounds = array<i64: 1>, scalar_prefetch = 0 : i64, scratch_operands = 0 : i64, tpu.core_type = #tpu.core_type<tc>, window_params = [{transform_indices = @transform_0, window_bounds = array<i64: 2, 1024>}, {transform_indices = @transform_1, window_bounds = array<i64: 2, 1024>}]} {
    %c0 = arith.constant 0 : index
    %c0_0 = arith.constant 0 : index
    %0 = vector.load %arg1[%c0, %c0_0] : memref<2x1024xf32, #tpu.memory_space<vmem>>, vector<2x1024xf32>
    %cst = arith.constant 0.000000e+00 : f32
    %1 = vector.broadcast %cst : f32 to vector<2x1024xf32>
    %2 = arith.maximumf %0, %1 : vector<2x1024xf32>
    %cst_1 = arith.constant 8.000000e+00 : f32
    %3 = vector.broadcast %cst_1 : f32 to vector<2x1024xf32>
    %4 = arith.minimumf %2, %3 : vector<2x1024xf32>
    %c0_2 = arith.constant 0 : index
    %c0_3 = arith.constant 0 : index
    %5 = vector.load %arg2[%c0_2, %c0_3] : memref<2x1024xf32, #tpu.memory_space<vmem>>, vector<2x1024xf32>
    tpu.vector_store %arg2[%c0_2, %c0_3], %4 {strides = array<i32>} : memref<2x1024xf32, #tpu.memory_space<vmem>>, vector<2x1024xf32>,
    return
  }
  func.func @transform_0(%arg0: i32) -> (i32, i32) {
    %c0_i32 = arith.constant 0 : i32
    %c0_i32_0 = arith.constant 0 : i32
    return %arg0, %c0_i32 : i32, i32
  }
  func.func @transform_1(%arg0: i32) -> (i32, i32) {
    %c0_i32 = arith.constant 0 : i32
    %c0_i32_0 = arith.constant 0 : i32
    return %arg0, %c0_i32 : i32, i32
  }
}

</mosaic_0001>

<llo_original>
// kernel: tpu_custom_call.1
$region0: #{tpu_custom_call.1}
  #allocation0 [shape = 'u32[]', space=smem, size = 0x4, offset = 0x4, fixed_abs, tag = 'smem constant byte address 0x4 - core index']
  #allocation1 [shape = 'u32[72,128]{1,0:T(1,128)}', space=vmem, size = 0x9000, scoped, tag = 'internal scratch']
  %s0 = inlined_call_operand.hbm [shape: f32[2,1024], index: 0, kind: input, shape index: {}]
  %s1 = inlined_call_operand.hbm [shape: f32[2,1024], index: 1, kind: output, shape index: {}]
  %s2 = sld [smem:[#allocation0]]
  $region18: #{tpu_custom_call.1} parent=0
    _
  %s4 = ssub.s32 1, %s2
  %s5 = scalar_select 0, %s4, %s2
  $region1: #{tpu_custom_call.1} parent=0
    #allocation2 [shape = 'u8[8192]{0}', space=vmem, size = 0x2000, scoped, tag = 'input window, operand 0, single buffered']
    #allocation3 [shape = 's32[1]{0}', space=sflag, size = 0x4, scoped, tag = 'scoped memory for tpu_custom_call.1']
    #allocation4 [shape = 's32[1]{0}', space=sflag, size = 0x4, scoped, tag = 'scoped memory for tpu_custom_call.1']
    #allocation5 [shape = 'u8[8192]{0}', space=vmem, size = 0x2000, scoped, tag = 'output window, operand 0, single buffered']
    %6 = vsyncpa [#allocation3], 0
    %7 = vsyncpa [#allocation4], 0
    // Predicated region
    $region2: #{tpu_custom_call.1} parent=1 // pred_check
      _
    $region3: #{tpu_custom_call.1} parent=1 // pred_check_branch
      %9 = sbr.rel (0) target = $region5
    $region4: #{tpu_custom_call.1} parent=1 // pred_region
      %11 = vsyncadd [#allocation3], 0
      %s13 = sshll.u32 %s0, 4
      %s14 = int_to_ptr.hbm [resolvable:$true] %s13
      %s15 = sshll.u32 [#allocation2], 4
      %s16 = int_to_ptr.vmem [resolvable:$true] %s15
      %18 = dma.hbm_to_vmem [thread:$0]  %s14, 256, %s16, [#allocation3]
    $region5: #{tpu_custom_call.1} parent=1 // pred_fallthru
      _
    // Predicated region
    $region6: #{tpu_custom_call.1} parent=1 // pred_check
      _
    $region7: #{tpu_custom_call.1} parent=1 // pred_check_branch
      %20 = sbr.rel (0) target = $region9
    $region8: #{tpu_custom_call.1} parent=1 // pred_region
      %22 = dma.done [#allocation3], 256
    $region9: #{tpu_custom_call.1} parent=1 // pred_fallthru
      _
    %v23 = vld [vmem:[#allocation2] sm:$0xff]
    %v24 = vld [vmem:[#allocation2 + $0x8] sm:$0xff]
    %v25 = vmax.f32 %v23, 0.0
    %v26 = vmax.f32 %v24, 0.0
    %v27 = vmin.f32 %v25, 8.0
    %v28 = vmin.f32 %v26, 8.0
    %29 = vst [vmem:[#allocation5] sm:$0xff] %v27
    %30 = vst [vmem:[#allocation5 + $0x8] sm:$0xff] %v28
    // Predicated region
    $region10: #{tpu_custom_call.1} parent=1 // pred_check
      _
    $region11: #{tpu_custom_call.1} parent=1 // pred_check_branch
      %32 = sbr.rel (0) target = $region13
    $region12: #{tpu_custom_call.1} parent=1 // pred_region
      %34 = vsyncadd [#allocation4], 0
      %s36 = sshll.u32 [#allocation5], 4
      %s37 = int_to_ptr.vmem [resolvable:$true] %s36
      %s38 = sshll.u32 %s1, 4
      %s39 = int_to_ptr.hbm [resolvable:$true] %s38
      %41 = dma.vmem_to_hbm [thread:$0]  %s37, 256, %s39, [#allocation4]
    $region13: #{tpu_custom_call.1} parent=1 // pred_fallthru
      _
    // Predicated region
    $region14: #{tpu_custom_call.1} parent=1 // pred_check
      _
    $region15: #{tpu_custom_call.1} parent=1 // pred_check_branch
      %43 = sbr.rel (0) target = $region17
    $region16: #{tpu_custom_call.1} parent=1 // pred_region
      %45 = dma.done [#allocation4], 256
    $region17: #{tpu_custom_call.1} parent=1 // pred_fallthru
      _
    %46 = vsyncpa [#allocation3], 1
    %47 = vsyncpa [#allocation4], 1

</llo_original>
